<compile_context>
chip_gen: v7x
topology: tpu7x:2x2x1
jax: 0.10.0
libtpu: 0.0.40
codegen_flags: <defaults>
</compile_context>

<pallas_src>
import jax
import jax.numpy as jnp
from jax.experimental import pallas as pl
from jax.experimental.pallas import tpu as pltpu

_SCALE = 1.0 / (1.1 * 1.004)  # fold the two divides into one multiply


def _clipswish_kernel(sb_ref, x_ref, out_ref):
    # sb_ref : (1, 1) SMEM scalar holding softplus(beta).
    # x_ref  : (1, C, T) VMEM input block.
    # out_ref: (1, 2C, T) VMEM output block (channel concat fused).
    sb = sb_ref[0, 0]
    x = x_ref[...]
    c = x.shape[1]

    s = jax.nn.sigmoid(x * sb)        # single EUP sigmoid per element
    xs = x * _SCALE                   # shared scaled input
    pos = xs * s                      #  x * sigmoid( x*sb) * SCALE
    neg = pos - xs                    # -x * sigmoid(-x*sb) * SCALE

    out_ref[:, :c, :] = pos.astype(out_ref.dtype)   # +x branch
    out_ref[:, c:, :] = neg.astype(out_ref.dtype)   # -x branch


def _pick_spatial_tile(hw, c, itemsize, vmem_budget_bytes=24 * 1024 * 1024):
    """Largest multiple-of-128 divisor of hw fitting the VMEM budget.

    Per grid step (double-buffered): 2*(C*T) input + 2*(2C*T) output
    = 6*C*T*itemsize bytes.  Falls back to the full extent (always legal)
    when hw is not a multiple of 128.
    """
    if hw % 128 != 0:
        return hw  # full extent of the lane axis is always a legal block
    max_t = max(128, vmem_budget_bytes // (6 * max(c, 1) * itemsize))
    if hw <= max_t:
        return hw
    t = (max_t // 128) * 128
    while t >= 128:
        if hw % t == 0:
            return t
        t -= 128
    return hw


def clipswish(x_nchw, beta):
    """x_nchw: [N, C, H, W]. beta: scalar Swish parameter (init 0.5).

    Returns [N, 2*C, H, W] == CLipSwish(x).
    """
    N, C, H, W = x_nchw.shape
    HW = H * W
    x3 = x_nchw.reshape(N, C, HW)

    # Stable softplus, computed once outside the kernel (single scalar).
    sb = jax.nn.softplus(jnp.asarray(beta, dtype=jnp.float32)).reshape(1, 1)

    tile = _pick_spatial_tile(HW, C, x3.dtype.itemsize)
    grid = (N, HW // tile)

    out = pl.pallas_call(
        _clipswish_kernel,
        out_shape=jax.ShapeDtypeStruct((N, 2 * C, HW), x3.dtype),
        grid=grid,
        in_specs=[
            pl.BlockSpec(memory_space=pltpu.MemorySpace.SMEM),        # sb scalar
            pl.BlockSpec((1, C, tile), lambda n, t: (n, 0, t)),       # x block
        ],
        out_specs=pl.BlockSpec((1, 2 * C, tile), lambda n, t: (n, 0, t)),
        compiler_params=pltpu.CompilerParams(
            dimension_semantics=("parallel", "parallel"),
            vmem_limit_bytes=64 * 1024 * 1024,
        ),
    )(sb, x3)

    # Contiguous reshape: (N, 2C, H*W) -> (N, 2C, H, W); no data movement.
    return out.reshape(N, 2 * C, H, W)


def _reference(x_nchw, beta):
    y = jnp.concatenate([x_nchw, -x_nchw], axis=1)
    sb = jax.nn.softplus(jnp.asarray(beta, dtype=jnp.float32))
    return (y * jax.nn.sigmoid(y * sb)) / 1.1 / 1.004


if __name__ == "__main__":
    key = jax.random.PRNGKey(0)
    x = jax.random.normal(key, (2, 4, 16, 16), dtype=jnp.float32)

    # Deterministic parameter init, matching nn.Parameter(torch.tensor([0.5]))
    beta = jnp.float32(0.5)

    out = jax.block_until_ready(clipswish(x, beta))
    ref = _reference(x, beta)

    assert out.shape == (2, 8, 16, 16), out.shape
    assert jnp.allclose(out, ref, atol=1e-5, rtol=1e-5), "mismatch vs reference"

    print("KERNEL_OK")
</pallas_src>

<mosaic_0001>
module attributes {stable_mosaic.version = 11 : i64} {
  func.func @_clipswish_kernel(%arg0: i32, %arg1: i32, %arg2: memref<1x1xf32, #tpu.memory_space<smem>>, %arg3: memref<1x4x256xf32, #tpu.memory_space<vmem>>, %arg4: memref<1x8x256xf32, #tpu.memory_space<vmem>>) attributes {dimension_semantics = [#tpu.dimension_semantics<parallel>, #tpu.dimension_semantics<parallel>], iteration_bounds = array<i64: 2, 1>, scalar_prefetch = 0 : i64, scratch_operands = 0 : i64, tpu.core_type = #tpu.core_type<tc>, window_params = [{transform_indices = @transform_0, window_bounds = array<i64: 1, 1>}, {transform_indices = @transform_1, window_bounds = array<i64: 1, 4, 256>}, {transform_indices = @transform_2, window_bounds = array<i64: 1, 8, 256>}]} {
    %c0 = arith.constant 0 : index
    %c0_0 = arith.constant 0 : index
    %0 = memref.load %arg2[%c0, %c0_0] : memref<1x1xf32, #tpu.memory_space<smem>>
    %c0_1 = arith.constant 0 : index
    %c0_2 = arith.constant 0 : index
    %c0_3 = arith.constant 0 : index
    %1 = vector.load %arg3[%c0_1, %c0_2, %c0_3] : memref<1x4x256xf32, #tpu.memory_space<vmem>>, vector<1x4x256xf32>
    %2 = vector.broadcast %0 : f32 to vector<1x4x256xf32>
    %3 = arith.mulf %1, %2 : vector<1x4x256xf32>
    %4 = arith.negf %3 : vector<1x4x256xf32>
    %5 = math.exp %4 : vector<1x4x256xf32>
    %cst = arith.constant 1.000000e+00 : f32
    %6 = vector.broadcast %cst : f32 to vector<1x4x256xf32>
    %7 = arith.addf %6, %5 : vector<1x4x256xf32>
    %8 = arith.divf %6, %7 : vector<1x4x256xf32>
    %cst_4 = arith.constant 0.905469059 : f32
    %9 = vector.broadcast %cst_4 : f32 to vector<1x4x256xf32>
    %10 = arith.mulf %1, %9 : vector<1x4x256xf32>
    %11 = arith.mulf %10, %8 : vector<1x4x256xf32>
    %12 = arith.subf %11, %10 : vector<1x4x256xf32>
    %c0_5 = arith.constant 0 : index
    %c0_6 = arith.constant 0 : index
    %c0_7 = arith.constant 0 : index
    %13 = vector.load %arg4[%c0_5, %c0_6, %c0_7] : memref<1x8x256xf32, #tpu.memory_space<vmem>>, vector<1x4x256xf32>
    tpu.vector_store %arg4[%c0_5, %c0_6, %c0_7], %11 {strides = array<i32>} : memref<1x8x256xf32, #tpu.memory_space<vmem>>, vector<1x4x256xf32>,
    %c0_8 = arith.constant 0 : index
    %c4 = arith.constant 4 : index
    %c0_9 = arith.constant 0 : index
    %14 = vector.load %arg4[%c0_8, %c4, %c0_9] : memref<1x8x256xf32, #tpu.memory_space<vmem>>, vector<1x4x256xf32>
    tpu.vector_store %arg4[%c0_8, %c4, %c0_9], %12 {strides = array<i32>} : memref<1x8x256xf32, #tpu.memory_space<vmem>>, vector<1x4x256xf32>,
    return
  }
  func.func @transform_0(%arg0: i32, %arg1: i32) -> (i32, i32) {
    %c0_i32 = arith.constant 0 : i32
    %c0_i32_0 = arith.constant 0 : i32
    %c0_i32_1 = arith.constant 0 : i32
    return %c0_i32, %c0_i32_0 : i32, i32
  }
  func.func @transform_1(%arg0: i32, %arg1: i32) -> (i32, i32, i32) {
    %c0_i32 = arith.constant 0 : i32
    %c0_i32_0 = arith.constant 0 : i32
    return %arg0, %c0_i32, %arg1 : i32, i32, i32
  }
  func.func @transform_2(%arg0: i32, %arg1: i32) -> (i32, i32, i32) {
    %c0_i32 = arith.constant 0 : i32
    %c0_i32_0 = arith.constant 0 : i32
    return %arg0, %c0_i32, %arg1 : i32, i32, i32
  }
}

</mosaic_0001>

<llo_original>
// kernel: tpu_custom_call.1
$region0: #{tpu_custom_call.1}
  #allocation0 [shape = 'u32[]', space=smem, size = 0x4, offset = 0x4, fixed_abs, tag = 'smem constant byte address 0x4 - core index']
  #allocation1 [shape = 'u32[144,128]{1,0:T(1,128)}', space=vmem, size = 0x12000, scoped, tag = 'internal scratch']
  #allocation2 [shape = 'f32[1,1]{1,0:T(1,128)S(6)}', space=smem, size = 0x200, scoped, tag = 'scoped memory for tpu_custom_call.1']
  %s0 = inlined_call_operand.<no memory space> [shape: f32[1,1], index: 0, kind: input, shape index: {}]
  %s1 = inlined_call_operand.hbm [shape: f32[2,4,256], index: 1, kind: input, shape index: {}]
  %s2 = inlined_call_operand.hbm [shape: f32[2,8,256], index: 2, kind: output, shape index: {}]
  %s3 = sld [smem:[#allocation0]]
  $region45: #{tpu_custom_call.1} parent=0
    _
  %s5 = ssub.s32 1, %s3
  %s6 = scalar_select 0, %s5, %s3
  %7 = sst [smem:[#allocation2]] %s0
  $region1: #{tpu_custom_call.1} parent=0
    #allocation3 [shape = 'u8[8192]{0}', space=vmem, size = 0x2000, scoped, tag = 'input window, operand 1']
    #allocation4 [shape = 's32[2]{0}', space=sflag, size = 0x8, scoped, tag = 'scoped memory for tpu_custom_call.1']
    #allocation5 [shape = 's32[2]{0}', space=sflag, size = 0x8, scoped, tag = 'scoped memory for tpu_custom_call.1']
    #allocation6 [shape = 'u8[16384]{0}', space=vmem, size = 0x4000, scoped, tag = 'output window, operand 0']
    %8 = vsyncpa [#allocation4], 0
    %s9 = scalar_lea.sflag [#allocation4], 1
    %10 = vsyncpa %s9, 0
    %11 = vsyncpa [#allocation5], 0
    %s12 = scalar_lea.sflag [#allocation5], 1
    %13 = vsyncpa %s12, 0
    loop: start=0, step=1, limit=4
    $region2: #{tpu_custom_call.1} parent=1 // loop_pre_header
      _
    $region3: #{tpu_custom_call.1} parent=1 // loop_header
      %s15 = sphi 0, %s19
      %p16 = scmp.ge.s32.totalorder %s15, 4
      %s22 = sphi 0, %s34
      %s23 = sphi 0, %s30
      %s24 = sphi 0, %s22
      %s25 = sphi 0, %s23
      %s26 = sphi 0, %s24
      %s27 = sphi 0, %s25
      %s35 = sphi 0, %s35
      %s37 = sphi 0, %s35
      %s38 = sphi 0, %s37
      %s52 = sphi 0, %s38
      %s60 = sphi 0, %s62
      %s63 = sphi 0, %s60
      %s64 = sphi 0, %s63
      %s80 = sphi 0, %s64
      %s88 = sphi 0, %s90
      %s91 = sphi 0, %s88
      %s92 = sphi 0, %s91
      %s108 = sphi 0, %s92
    $region4: #{tpu_custom_call.1} parent=1 // loop_header_branch
      %18 = sbr.rel (%p16) target = $region8
    $region5: #{tpu_custom_call.1} parent=1 // loop_body
      %s20 = ssub.s32 %s15, 1
      %s21 = ssub.s32 %s15, 2
      %s28 = sadd.s32 1, %s23
      %p29 = scmp.ge.s32.totalorder %s28, 1
      %s30 = scalar_select %p29, 0, %s28
      %s31 = sadd.s32 1, %s22
      %s32 = scalar_select %p29, %s31, %s22
      %p33 = scmp.ge.s32.totalorder %s32, 2
      %s34 = scalar_select %p33, 0, %s32
      %s36 = sadd.s32 %s35, 1
      %p39 = scmp.eq.s32.totalorder %s15, 1
      %p40 = scmp.ne.s32.totalorder %s35, %s37
      %p41 = scmp.eq.s32.totalorder %s15, 0
      %p42 = por %p40, %p41
      %p43 = scmp.ne.s32.totalorder %s35, %s37
      %p44 = scmp.eq.s32.totalorder %s20, 1
      %p45 = por %p43, %p44
      %p46 = scmp.ne.s32.totalorder %s37, %s38
      %p47 = scmp.eq.s32.totalorder %s20, 0
      %p48 = por %p46, %p47
      %p49 = scmp.ne.s32.totalorder %s37, %s38
      %p50 = scmp.eq.s32.totalorder %s21, 1
      %p51 = por %p49, %p50
      %p53 = scmp.ne.s32.totalorder %s38, %s52
      %p54 = scmp.eq.s32.totalorder %s21, 0
      %p55 = por %p53, %p54
      %s56 = ssub.s32 %s22, %s34
      %s57 = ssub.s32 %s23, %s30
      %s58 = sor.u32 %s56, %s57
      %p59 = scmp.eq.s32.totalorder %s58, 0
      %s61 = sadd.s32 %s60, 1
      %s62 = scalar_select %p59, %s60, %s61
      %p65 = pneg %p59
      %p66 = scmp.eq.s32.totalorder %s15, 1
      %p67 = por %p65, %p66
      %p68 = scmp.ne.s32.totalorder %s60, %s63
      %p69 = scmp.eq.s32.totalorder %s15, 0
      %p70 = por %p68, %p69
      %p71 = scmp.ne.s32.totalorder %s60, %s63
      %p72 = scmp.eq.s32.totalorder %s20, 1
      %p73 = por %p71, %p72
      %p74 = scmp.ne.s32.totalorder %s63, %s64
      %p75 = scmp.eq.s32.totalorder %s20, 0
      %p76 = por %p74, %p75
      %p77 = scmp.ne.s32.totalorder %s63, %s64
      %p78 = scmp.eq.s32.totalorder %s21, 1
      %p79 = por %p77, %p78
      %p81 = scmp.ne.s32.totalorder %s64, %s80
      %p82 = scmp.eq.s32.totalorder %s21, 0
      %p83 = por %p81, %p82
      %s84 = ssub.s32 %s22, %s34
      %s85 = ssub.s32 %s23, %s30
      %s86 = sor.u32 %s84, %s85
      %p87 = scmp.eq.s32.totalorder %s86, 0
      %s89 = sadd.s32 %s88, 1
      %s90 = scalar_select %p87, %s88, %s89
      %p93 = pneg %p87
      %p94 = scmp.eq.s32.totalorder %s15, 1
      %p95 = por %p93, %p94
      %p96 = scmp.ne.s32.totalorder %s88, %s91
      %p97 = scmp.eq.s32.totalorder %s15, 0
      %p98 = por %p96, %p97
      %p99 = scmp.ne.s32.totalorder %s88, %s91
      %p100 = scmp.eq.s32.totalorder %s20, 1
      %p101 = por %p99, %p100
      %p102 = scmp.ne.s32.totalorder %s91, %s92
      %p103 = scmp.eq.s32.totalorder %s20, 0
      %p104 = por %p102, %p103
      %p105 = scmp.ne.s32.totalorder %s91, %s92
      %p106 = scmp.eq.s32.totalorder %s21, 1
      %p107 = por %p105, %p106
      %p109 = scmp.ne.s32.totalorder %s92, %s108
      %p110 = scmp.eq.s32.totalorder %s21, 0
      %p111 = por %p109, %p110
      %p112 = scmp.le.s32.totalorder 1, %s15
      %p113 = scmp.lt.s32.totalorder %s15, 3
      %p114 = pnand %p112, %p113
      %p115 = pneg %p114
      // Predicated region
      $region9: #{tpu_custom_call.1} parent=5 // pred_check
        _
      $region10: #{tpu_custom_call.1} parent=5 // pred_check_branch
        %117 = sbr.rel (%p114) target = $region12
      $region11: #{tpu_custom_call.1} parent=5 // pred_region
        %s118 = ssub.s32 %s15, 1
        // Predicated region
        $region13: #{tpu_custom_call.1} parent=11 // pred_check
          %p119 = pneg %p48
        $region14: #{tpu_custom_call.1} parent=11 // pred_check_branch
          %121 = sbr.rel (%p119) target = $region16
        $region15: #{tpu_custom_call.1} parent=11 // pred_region
          _
        $region16: #{tpu_custom_call.1} parent=11 // pred_fallthru
          _
      $region12: #{tpu_custom_call.1} parent=5 // pred_fallthru
        _
      %p122 = scmp.lt.s32.totalorder %s15, 2
      // Predicated region
      $region17: #{tpu_custom_call.1} parent=5 // pred_check
        %p123 = pneg %p122
      $region18: #{tpu_custom_call.1} parent=5 // pred_check_branch
        %125 = sbr.rel (%p123) target = $region20
      $region19: #{tpu_custom_call.1} parent=5 // pred_region
        // Predicated region
        $region21: #{tpu_custom_call.1} parent=19 // pred_check
          %p126 = pneg %p70
        $region22: #{tpu_custom_call.1} parent=19 // pred_check_branch
          %128 = sbr.rel (%p126) target = $region24
        $region23: #{tpu_custom_call.1} parent=19 // pred_region
          %s129 = sand.u32 %s60, 1
          %s130 = scalar_lea.sflag [#allocation4], %s129
          %s131 = sand.u32 %s60, 1
          %s132 = smul.addr %s131, 8
          %s133 = scalar_lea.vmem [#allocation3], %s132
          %s134 = smul.u32 2, %s23
          %s136 = ssub.s32 128, 128
          %137 = vsyncadd %s130, %s136
          %s138 = smul.addr %s22, 2
          %s139 = sadd.s32 %s134, %s138
          %s140 = smul.addr %s139, 64
          %s141 = scalar_lea.hbm %s1, %s140
          %s143 = sshll.u32 %s133, 4
          %s144 = int_to_ptr.vmem [resolvable:$true] %s143
          %146 = dma.hbm_to_vmem [thread:$0]  %s141, 128, %s144, %s130
        $region24: #{tpu_custom_call.1} parent=19 // pred_fallthru
          _
      $region20: #{tpu_custom_call.1} parent=5 // pred_fallthru
        _
      %p147 = scmp.le.s32.totalorder 1, %s15
      %p148 = scmp.lt.s32.totalorder %s15, 3
      %p149 = pnand %p147, %p148
      %p150 = pneg %p149
      // Predicated region
      $region25: #{tpu_custom_call.1} parent=5 // pred_check
        _
      $region26: #{tpu_custom_call.1} parent=5 // pred_check_branch
        %152 = sbr.rel (%p149) target = $region28
      $region27: #{tpu_custom_call.1} parent=5 // pred_region
        %s153 = ssub.s32 %s15, 1
        %s154 = sand.u32 %s63, 1
        %s155 = scalar_lea.sflag [#allocation4], %s154
        %s156 = sand.u32 %s63, 1
        %s157 = smul.addr %s156, 8
        %s158 = scalar_lea.vmem [#allocation3], %s157
        // Predicated region
        $region29: #{tpu_custom_call.1} parent=27 // pred_check
          %p159 = pneg %p76
        $region30: #{tpu_custom_call.1} parent=27 // pred_check_branch
          %161 = sbr.rel (%p159) target = $region32
        $region31: #{tpu_custom_call.1} parent=27 // pred_region
          %162 = dma.done %s155, 128
        $region32: #{tpu_custom_call.1} parent=27 // pred_fallthru
          _
        %p163 = pneg %p48
        %p164 = pneg %p45
        %s165 = sand.u32 %s63, 1
        %s166 = scalar_lea.sflag [#allocation4], %s165
        %s167 = sand.u32 %s63, 1
        %s168 = smul.addr %s167, 8
        %s169 = scalar_lea.vmem [#allocation3], %s168
        %p170 = pneg %p76
        %p171 = pneg %p73
        %p172 = pneg %p104
        %p173 = pneg %p101
        %s174 = sand.u32 %s91, 1
        %s175 = scalar_lea.sflag [#allocation5], %s174
        %s176 = sand.u32 %s91, 1
        %s177 = smul.addr %s176, 16
        %s178 = scalar_lea.vmem [#allocation6], %s177
        %s179 = smul.u32 2, %s25
        %s180 = smul.u32 2, %s25
        %s181 = sld [smem:[#allocation2]]
        %v182 = vld [vmem:[%s158] sm:$0xff]
        %v183 = vstv %s181
        %v184 = vmul.f32 %v182, %v183
        %v185 = vxor.u32 %v184, 2147483648
        %v186 = vmul.f32 %v185, 1.442695
        %v187 = vpow.pop %v186
        %v188 = vadd.f32 %v187, 1.0
        %v189 = vrcp.pop %v188
        %v190 = vmul.f32 1.0, %v189
        %v191 = vmul.f32 %v182, 0.90546906
        %v192 = vmul.f32 %v191, %v190
        %v193 = vsub.f32 %v192, %v191
        %v195 = vcombine.high %v192, %v192
        %197 = vst [vmem:[%s178] sm:$0xf] %v192
        %198 = vst [vmem:[%s178 + $0x8] sm:$0xf] %v195
        %v200 = vcombine.low %v193, %v193
        %202 = vst [vmem:[%s178] sm:$0xf0] %v200
        %203 = vst [vmem:[%s178 + $0x8] sm:$0xf0] %v193
        %s204 = sand.u32 %s91, 1
        %s205 = scalar_lea.sflag [#allocation5], %s204
        %s206 = sand.u32 %s91, 1
        %s207 = smul.addr %s206, 16
        %s208 = scalar_lea.vmem [#allocation6], %s207
        // Predicated region
        $region33: #{tpu_custom_call.1} parent=27 // pred_check
          %p209 = pneg %p101
        $region34: #{tpu_custom_call.1} parent=27 // pred_check_branch
          %211 = sbr.rel (%p209) target = $region36
        $region35: #{tpu_custom_call.1} parent=27 // pred_region
          %s212 = smul.u32 2, %s25
          %s214 = ssub.s32 256, 256
          %215 = vsyncadd %s205, %s214
          %s216 = smul.addr %s24, 2
          %s217 = sadd.s32 %s212, %s216
          %s218 = smul.addr %s217, 128
          %s219 = scalar_lea.hbm %s2, %s218
          %s221 = sshll.u32 %s208, 4
          %s222 = int_to_ptr.vmem [resolvable:$true] %s221
          %224 = dma.vmem_to_hbm [thread:$0]  %s222, 256, %s219, %s205
        $region36: #{tpu_custom_call.1} parent=27 // pred_fallthru
          _
      $region28: #{tpu_custom_call.1} parent=5 // pred_fallthru
        _
      %p225 = scmp.le.s32.totalorder 2, %s15
      // Predicated region
      $region37: #{tpu_custom_call.1} parent=5 // pred_check
        %p226 = pneg %p225
      $region38: #{tpu_custom_call.1} parent=5 // pred_check_branch
        %228 = sbr.rel (%p226) target = $region40
      $region39: #{tpu_custom_call.1} parent=5 // pred_region
        %s229 = ssub.s32 %s15, 2
        // Predicated region
        $region41: #{tpu_custom_call.1} parent=39 // pred_check
          %p230 = pneg %p107
        $region42: #{tpu_custom_call.1} parent=39 // pred_check_branch
          %232 = sbr.rel (%p230) target = $region44
        $region43: #{tpu_custom_call.1} parent=39 // pred_region
          %s233 = sand.u32 %s92, 1
          %s234 = scalar_lea.sflag [#allocation5], %s233
          %s235 = sand.u32 %s92, 1
          %s236 = smul.addr %s235, 16
          %s237 = scalar_lea.vmem [#allocation6], %s236
          %238 = dma.done %s234, 256
        $region44: #{tpu_custom_call.1} parent=39 // pred_fallthru
          _
      $region40: #{tpu_custom_call.1} parent=5 // pred_fallthru
        _
    $region6: #{tpu_custom_call.1} parent=1 // loop_footer
      %s19 = sadd.s32 1, %s15
    $region7: #{tpu_custom_call.1} parent=1 // loop_footer_branch
      %14 = sbr.rel target = $region3
    $region8: #{tpu_custom_call.1} parent=1 // loop_exit
      _
    %239 = vsyncpa [#allocation4], 1
    %s240 = scalar_lea.sflag [#allocation4], 1
    %241 = vsyncpa %s240, 1
    %242 = vsyncpa [#allocation5], 1
    %s243 = scalar_lea.sflag [#allocation5], 1
    %244 = vsyncpa %s243, 1

</llo_original>
